<compile_context>
chip_gen: v7x
topology: tpu7x:2x2x1
jax: 0.10.0
libtpu: 0.0.40
codegen_flags: <defaults>
</compile_context>

<pallas_src>
import functools

import jax
import jax.numpy as jnp
from jax.experimental import pallas as pl
from jax.experimental.pallas import tpu as pltpu


def _round_up(x, m):
    return ((x + m - 1) // m) * m


def integral_kernel(x_ref, p_ref, o_ref):
    # x_ref: (TM, 6*K) logits tile (rows of the regression head, lane-dense)
    # p_ref: (6*K, 12) block-structured projection: cols 0..5 = project blocks,
    #        cols 6..11 = ones blocks (softmax denominators)
    # o_ref: (TM, 6) integral results
    x = x_ref[...].astype(jnp.float32)                     # (TM, C)
    m = jnp.max(x, axis=-1, keepdims=True)                 # (TM, 1) one XLU reduce/row
    e = jnp.exp(x - m)                                     # (TM, C), values in (0, 1]
    # Canonical LHS-minor-dim contraction on the MXU: (TM, C) @ (C, 12) -> (TM, 12)
    nd = jnp.dot(e, p_ref[...], preferred_element_type=jnp.float32)
    num = nd[:, 0:6]                                       # sum_k e * project  (per group)
    den = nd[:, 6:12]                                      # sum_k e            (per group)
    o_ref[...] = (num * pl.reciprocal(den, approx=True)).astype(o_ref.dtype)


@functools.partial(jax.jit, static_argnames=("reg_max", "tile_m"))
def integral_forward(x, project, reg_max=16, tile_m=4096):
    """x: (..., 6*(reg_max+1)) -> (prod(leading), 6); same semantics as torch module."""
    K = reg_max + 1
    C = 6 * K
    xr = x.reshape(-1, C)                                  # (M, C), free reshape
    M = xr.shape[0]
    out_dtype = x.dtype

    # Dtype-aware sublane rounding: 8 rows for f32, 16 for bf16, 32 for int8/fp8.
    itemsize = jnp.dtype(x.dtype).itemsize
    sub = 8 * max(1, 4 // itemsize)
    tm = min(_round_up(tile_m, sub), _round_up(M, sub))
    num_tiles = pl.cdiv(M, tm)

    # Block-structured projection matrix (C, 12):
    #   col g      : project over group g's K slots   (numerator)
    #   col 6 + g  : ones over group g's K slots      (denominator)
    proj = project.astype(jnp.float32)
    pmat = jnp.zeros((C, 12), jnp.float32)
    for g in range(6):
        pmat = pmat.at[g * K:(g + 1) * K, g].set(proj)
        pmat = pmat.at[g * K:(g + 1) * K, 6 + g].set(1.0)

    cost = pl.CostEstimate(
        flops=int(2 * M * C * 12 + 3 * M * C),
        transcendentals=int(M * C + M * 6),
        bytes_accessed=int(M * C * itemsize
                           + M * 6 * jnp.dtype(out_dtype).itemsize
                           + C * 12 * 4),
    )

    out = pl.pallas_call(
        integral_kernel,
        out_shape=jax.ShapeDtypeStruct((M, 6), out_dtype),
        grid_spec=pltpu.PrefetchScalarGridSpec(
            num_scalar_prefetch=0,
            grid=(num_tiles,),
            in_specs=[
                pl.BlockSpec((tm, C), lambda i: (i, 0)),   # logits row tile
                pl.BlockSpec((C, 12), lambda i: (0, 0)),   # projection matrix (resident)
            ],
            out_specs=pl.BlockSpec((tm, 6), lambda i: (i, 0)),
        ),
        compiler_params=pltpu.CompilerParams(
            dimension_semantics=("parallel",)),
        cost_estimate=cost,
    )(xr, pmat)
    return out


def integral_reference(x, project, reg_max=16):
    K = reg_max + 1
    xr = x.reshape(-1, K).astype(jnp.float32)
    p = jax.nn.softmax(xr, axis=1)
    return (p @ project.astype(jnp.float32)).reshape(-1, 6).astype(x.dtype)


if __name__ == "__main__":
    reg_max = 16
    K = reg_max + 1

    # The module's registered buffer: linspace(0, reg_max, reg_max+1) / reg_max.
    project = jnp.linspace(0.0, float(reg_max), K, dtype=jnp.float32) / float(reg_max)

    key = jax.random.PRNGKey(0)

    # Small shape matching the module's documented input: (N, 6*(reg_max+1)).
    N = 24
    x = jax.random.normal(key, (N, 6 * K), dtype=jnp.float32)
    out = jax.block_until_ready(integral_forward(x, project, reg_max=reg_max))
    ref = integral_reference(x, project, reg_max=reg_max)
    assert out.shape == (N, 6), f"bad shape {out.shape}"
    assert jnp.allclose(out, ref, atol=5e-3, rtol=5e-3), "mismatch vs reference"

    # Second small case exercising multiple tiles and a ragged last block.
    N2 = 100
    x2 = jax.random.normal(jax.random.PRNGKey(1), (N2, 6 * K), dtype=jnp.float32) * 3.0
    out2 = jax.block_until_ready(
        integral_forward(x2, project, reg_max=reg_max, tile_m=32))
    ref2 = integral_reference(x2, project, reg_max=reg_max)
    assert out2.shape == (N2, 6), f"bad shape {out2.shape}"
    assert jnp.allclose(out2, ref2, atol=5e-3, rtol=5e-3), "mismatch vs reference (ragged)"

    print("KERNEL_OK")
</pallas_src>

<mosaic_0001>
module attributes {stable_mosaic.version = 11 : i64} {
  func.func @integral_kernel(%arg0: i32, %arg1: memref<24x102xf32, #tpu.memory_space<vmem>>, %arg2: memref<102x12xf32, #tpu.memory_space<vmem>>, %arg3: memref<24x6xf32, #tpu.memory_space<vmem>>) attributes {dimension_semantics = [#tpu.dimension_semantics<parallel>], iteration_bounds = array<i64: 1>, scalar_prefetch = 0 : i64, scratch_operands = 0 : i64, tpu.core_type = #tpu.core_type<tc>, window_params = [{transform_indices = @transform_0, window_bounds = array<i64: 24, 102>}, {pipeline_mode = #tpu.pipeline_mode<synchronous>, transform_indices = @transform_1, window_bounds = array<i64: 102, 12>}, {transform_indices = @transform_2, window_bounds = array<i64: 24, 6>}]} {
    %c0 = arith.constant 0 : index
    %c0_0 = arith.constant 0 : index
    %0 = vector.load %arg1[%c0, %c0_0] : memref<24x102xf32, #tpu.memory_space<vmem>>, vector<24x102xf32>
    %cst = arith.constant dense<0xFF800000> : vector<24xf32>
    %1 = vector.multi_reduction <maximumf>, %0, %cst [1] : vector<24x102xf32> to vector<24xf32>
    %2 = vector.shape_cast %1 : vector<24xf32> to vector<24x1xf32>
    %3 = vector.broadcast %2 : vector<24x1xf32> to vector<24x102xf32>
    %4 = arith.subf %0, %3 : vector<24x102xf32>
    %5 = math.exp %4 : vector<24x102xf32>
    %c0_1 = arith.constant 0 : index
    %c0_2 = arith.constant 0 : index
    %6 = vector.load %arg2[%c0_1, %c0_2] : memref<102x12xf32, #tpu.memory_space<vmem>>, vector<102x12xf32>
    %cst_3 = arith.constant dense<0.000000e+00> : vector<24x12xf32>
    %7 = tpu.matmul %5, %6, %cst_3 {dimension_numbers = #tpu.dot_dimension_numbers<[1], [0], [0], [1], [0, 0, 1, 1], [], []>} : vector<24x102xf32>, vector<102x12xf32>, vector<24x12xf32> -> vector<24x12xf32>
    %8 = vector.extract_strided_slice %7 {offsets = [0, 0], sizes = [24, 6], strides = [1, 1]} : vector<24x12xf32> to vector<24x6xf32>
    %9 = vector.extract_strided_slice %7 {offsets = [0, 6], sizes = [24, 6], strides = [1, 1]} : vector<24x12xf32> to vector<24x6xf32>
    %10 = tpu.reciprocal %9 {approx = true} : vector<24x6xf32> -> vector<24x6xf32>
    %11 = arith.mulf %8, %10 : vector<24x6xf32>
    %c0_4 = arith.constant 0 : index
    %c0_5 = arith.constant 0 : index
    %12 = vector.load %arg3[%c0_4, %c0_5] : memref<24x6xf32, #tpu.memory_space<vmem>>, vector<24x6xf32>
    tpu.vector_store %arg3[%c0_4, %c0_5], %11 {strides = array<i32>} : memref<24x6xf32, #tpu.memory_space<vmem>>, vector<24x6xf32>,
    return
  }
  func.func @transform_0(%arg0: i32) -> (i32, i32) {
    %c0_i32 = arith.constant 0 : i32
    %c0_i32_0 = arith.constant 0 : i32
    return %arg0, %c0_i32 : i32, i32
  }
  func.func @transform_1(%arg0: i32) -> (i32, i32) {
    %c0_i32 = arith.constant 0 : i32
    %c0_i32_0 = arith.constant 0 : i32
    %c0_i32_1 = arith.constant 0 : i32
    return %c0_i32, %c0_i32_0 : i32, i32
  }
  func.func @transform_2(%arg0: i32) -> (i32, i32) {
    %c0_i32 = arith.constant 0 : i32
    %c0_i32_0 = arith.constant 0 : i32
    return %arg0, %c0_i32 : i32, i32
  }
}

</mosaic_0001>

<llo_original>
// kernel: integral_forward.1
$region0: #{integral_forward.1}
  #allocation0 [shape = 'u32[]', space=smem, size = 0x4, offset = 0x4, fixed_abs, tag = 'smem constant byte address 0x4 - core index']
  #allocation1 [shape = 'u32[144,128]{1,0:T(1,128)}', space=vmem, size = 0x12000, scoped, tag = 'internal scratch']
  %s0 = inlined_call_operand.vmem [shape: f32[24,102], index: 0, kind: input, shape index: {}]
  %s1 = inlined_call_operand.vmem [shape: f32[102,12], index: 1, kind: input, shape index: {}]
  %s2 = inlined_call_operand.vmem [shape: f32[24,6], index: 2, kind: output, shape index: {}]
  %s3 = sld [smem:[#allocation0]]
  $region18: #{integral_forward.1} parent=0
    _
  %s5 = ssub.s32 1, %s3
  %s6 = scalar_select 0, %s5, %s3
  // Predicated region
  $region2: #{integral_forward.1} parent=0 // pred_check
    _
  $region3: #{integral_forward.1} parent=0 // pred_check_branch
    %8 = sbr.rel (0) target = $region5
  $region4: #{integral_forward.1} parent=0 // pred_region
    _
  $region5: #{integral_forward.1} parent=0 // pred_fallthru
    _
  // Predicated region
  $region6: #{integral_forward.1} parent=0 // pred_check
    _
  $region7: #{integral_forward.1} parent=0 // pred_check_branch
    %10 = sbr.rel (0) target = $region9
  $region8: #{integral_forward.1} parent=0 // pred_region
    _
  $region9: #{integral_forward.1} parent=0 // pred_fallthru
    _
  %v11 = vld [vmem:[%s0] sm:$0xff]
  %v12 = vld [vmem:[%s0 + $0x8] sm:$0xff]
  %v13 = vld [vmem:[%s0 + $0x10] sm:$0xff]
  %vm14 = vcmask 834560
  %v15 = vsel %vm14, %v11, -inf
  %16 = vmax.xlane.f32.xlu0 %v15
  %v17 = vpop.xlane.xlu0 %16
  %v18 = vsel %vm14, %v12, -inf
  %19 = vmax.xlane.f32.xlu0 %v18
  %v20 = vpop.xlane.xlu0 %19
  %v21 = vsel %vm14, %v13, -inf
  %22 = vmax.xlane.f32.xlu0 %v21
  %v23 = vpop.xlane.xlu0 %22
  %v24 = vsub.f32 %v11, %v17
  %v25 = vsub.f32 %v12, %v20
  %v26 = vsub.f32 %v13, %v23
  %v27 = vmul.f32 %v24, 1.442695
  %v28 = vpow.pop %v27
  %v29 = vmul.f32 %v25, 1.442695
  %v30 = vpow.pop %v29
  %v31 = vmul.f32 %v26, 1.442695
  %v32 = vpow.pop %v31
  %v33 = vld [vmem:[%s1] sm:$0xff]
  %v34 = vld [vmem:[%s1 + $0x8] sm:$0xff]
  %v35 = vld [vmem:[%s1 + $0x10] sm:$0xff]
  %v36 = vld [vmem:[%s1 + $0x18] sm:$0xff]
  %v37 = vld [vmem:[%s1 + $0x20] sm:$0xff]
  %v38 = vld [vmem:[%s1 + $0x28] sm:$0xff]
  %v39 = vld [vmem:[%s1 + $0x30] sm:$0xff]
  %v40 = vld [vmem:[%s1 + $0x38] sm:$0xff]
  %v41 = vld [vmem:[%s1 + $0x40] sm:$0xff]
  %v42 = vld [vmem:[%s1 + $0x48] sm:$0xff]
  %v43 = vld [vmem:[%s1 + $0x50] sm:$0xff]
  %v44 = vld [vmem:[%s1 + $0x58] sm:$0xff]
  %v45 = vld [vmem:[%s1 + $0x60] sm:$0x3f]
  %v47 = vsel %vm14, %v28, 0
  %v50 = vsel %vm14, %v30, 0
  %v53 = vsel %vm14, %v32, 0
  %vm55 = vcmask 1045504
  %v57 = vsel %vm55, %v45, 0
  %59 = vmatprep.subr.mxu0 0.0
  %60 = vmatpush1.msra.mxu0 %v33
  %61 = vmatprep.subr.mxu0 0.0
  %62 = vmatpush1.msra.mxu0 %v34
  %63 = vmatprep.subr.mxu0 0.0
  %64 = vmatpush1.msra.mxu0 %v35
  %65 = vmatprep.subr.mxu0 0.0
  %66 = vmatpush1.msra.mxu0 %v36
  %67 = vmatprep.subr.mxu0 0.0
  %68 = vmatpush1.msra.mxu0 %v37
  %69 = vmatprep.subr.mxu0 0.0
  %70 = vmatpush1.msra.mxu0 %v38
  %71 = vmatprep.subr.mxu0 0.0
  %72 = vmatpush1.msra.mxu0 %v39
  %73 = vmatprep.subr.mxu0 0.0
  %74 = vmatpush1.msra.mxu0 %v40
  %75 = vmatprep.subr.mxu0 0.0
  %76 = vmatpush1.msra.mxu0 %v41
  %77 = vmatprep.subr.mxu0 0.0
  %78 = vmatpush1.msra.mxu0 %v42
  %79 = vmatprep.subr.mxu0 0.0
  %80 = vmatpush1.msra.mxu0 %v43
  %81 = vmatprep.subr.mxu0 0.0
  %82 = vmatpush1.msra.mxu0 %v44
  %83 = vmatprep.subr.mxu0 0.0
  %84 = vmatpush1.msra.mxu0 %v57
  %85 = vmatprep.subr.mxu0 0.0
  %86 = vmatpush1.msra.mxu0 0.0
  %87 = vmatprep.subr.mxu0 0.0
  %88 = vmatpush1.msra.mxu0 0.0
  %89 = vmatprep.subr.mxu0 0.0
  %90 = vmatpush1.msra.mxu0 0.0
  %91 = vmatprep.subr.mxu0 0.0
  %92 = vmatpush1.msra.mxu0 0.0
  %93 = vmatprep.subr.mxu0 0.0
  %94 = vmatpush1.msra.mxu0 0.0
  %95 = vmatprep.subr.mxu0 0.0
  %96 = vmatpush1.msra.mxu0 0.0
  %97 = vmatprep.subr.mxu0 0.0
  %98 = vmatpush1.msra.mxu0 0.0
  %99 = vmatprep.subr.mxu0 0.0
  %100 = vmatpush1.msra.mxu0 0.0
  %101 = vmatprep.subr.mxu0 0.0
  %102 = vmatpush1.msra.mxu0 0.0
  %103 = vmatprep.subr.mxu0 0.0
  %104 = vmatpush1.msra.mxu0 0.0
  %105 = vmatprep.subr.mxu0 0.0
  %106 = vmatpush1.msra.mxu0 0.0
  %107 = vmatprep.subr.mxu0 0.0
  %108 = vmatpush1.msra.mxu0 0.0
  %109 = vmatprep.subr.mxu0 0.0
  %110 = vmatpush1.msra.mxu0 0.0
  %111 = vmatprep.subr.mxu0 0.0
  %112 = vmatpush1.msra.mxu0 0.0
  %113 = vmatprep.subr.mxu0 0.0
  %114 = vmatpush1.msra.mxu0 0.0
  %115 = vmatprep.subr.mxu0 0.0
  %116 = vmatpush1.msra.mxu0 0.0
  %117 = vmatprep.subr.mxu0 0.0
  %118 = vmatpush1.msra.mxu0 0.0
  %119 = vmatprep.subr.mxu0 0.0
  %120 = vmatpush1.msra.mxu0 0.0
  %121 = vmatprep.subr.mxu0 0.0
  %122 = vmatpush1.msra.mxu0 0.0
  %123 = vmatprep.mubr.f32.mxu0 0.0
  %124 = vmatmul.mubr.f32.gmra.mrb[0].mxu0 %v47
  %v125 = vpop.f32.mrb[0].mxu0
  %v126 = vadd.f32 0.0, %v125
  %v127 = vpop.f32.mrb[0].mxu0
  %128 = vmatprep.mubr.f32.mxu0 0.0
  %129 = vmatmul.mubr.f32.gmra.mrb[0].mxu0 %v50
  %v130 = vpop.f32.mrb[0].mxu0
  %v131 = vadd.f32 0.0, %v130
  %v132 = vpop.f32.mrb[0].mxu0
  %133 = vmatprep.mubr.f32.mxu0 0.0
  %134 = vmatmul.mubr.f32.gmra.mrb[0].mxu0 %v53
  %v135 = vpop.f32.mrb[0].mxu0
  %v136 = vadd.f32 0.0, %v135
  %v137 = vpop.f32.mrb[0].mxu0
  %138 = vdwg.mxu0
  %v139 = vrcp.pop %v126
  %v140 = vrcp.pop %v131
  %v141 = vrcp.pop %v136
  %145 = vrot.lane.b32.xlu0 %v139, 122
  %v146 = vpop.permute.xlu0 %145
  %147 = vrot.lane.b32.xlu0 %v140, 122
  %v148 = vpop.permute.xlu0 %147
  %149 = vrot.lane.b32.xlu0 %v141, 122
  %v150 = vpop.permute.xlu0 %149
  %v154 = vmul.f32 %v126, %v146
  %v155 = vmul.f32 %v131, %v148
  %v156 = vmul.f32 %v136, %v150
  %vm157 = vcmask 48128
  %158 = vst.msk [vmem:[%s2] sm:$0xff] %vm157, %v154
  %159 = vst.msk [vmem:[%s2 + $0x8] sm:$0xff] %vm157, %v155
  %160 = vst.msk [vmem:[%s2 + $0x10] sm:$0xff] %vm157, %v156
  // Predicated region
  $region10: #{integral_forward.1} parent=0 // pred_check
    _
  $region11: #{integral_forward.1} parent=0 // pred_check_branch
    %162 = sbr.rel (0) target = $region13
  $region12: #{integral_forward.1} parent=0 // pred_region
    _
  $region13: #{integral_forward.1} parent=0 // pred_fallthru
    _
  // Predicated region
  $region14: #{integral_forward.1} parent=0 // pred_check
    _
  $region15: #{integral_forward.1} parent=0 // pred_check_branch
    %164 = sbr.rel (0) target = $region17
  $region16: #{integral_forward.1} parent=0 // pred_region
    _
  $region17: #{integral_forward.1} parent=0 // pred_fallthru
    _

</llo_original>
